<compile_context>
chip_gen: v6e
topology: v6e:2x2x1
jax: 0.10.0
libtpu: 0.0.40
codegen_flags: <defaults>
</compile_context>

<pallas_src>
import jax
import jax.numpy as jnp
from jax.experimental import pallas as pl
from jax.experimental.pallas import tpu as pltpu

STATE_SIZE = 33
ACTION_SIZE = 4
IN_SIZE = STATE_SIZE + ACTION_SIZE   # 37 — layer-1 fused into one matmul
HIDDEN1 = 256
HIDDEN2 = 256


def _round_up(x, m):
    return (x + m - 1) // m * m


def _batch_tiling(batch):
    """Pick (tile, padded_batch). Small batches -> one tile (block == full
    array dims, so the (8,128) rule is satisfied). Larger batches -> >=2
    lane-aligned tiles (multiple of 128, capped at 1024) so v7x's two
    TensorCores both get work and per-step overhead is amortized."""
    b8 = _round_up(batch, 8)
    if b8 < 256:
        tb = b8
    else:
        tb = min(1024, _round_up(pl.cdiv(b8, 2), 128))
    b_pad = _round_up(batch, tb)
    return tb, b_pad


def _critic_block(x, w1_ref, b1_ref, w2_ref, b2_ref, w3_ref, b3_ref):
    """One critic MLP on a (TB, IN_SIZE) tile -> lane-dense (1, TB) Q row."""
    # f32 weights => request exact f32 MXU passes; bf16 uses the native path.
    prec = (jax.lax.Precision.HIGHEST
            if w1_ref.dtype == jnp.float32 else None)

    # Layer 1: single K=37 matmul (concat fused at the wrapper), f32 acc.
    h1 = jnp.dot(x, w1_ref[...], preferred_element_type=jnp.float32,
                 precision=prec)
    h1 = jnp.maximum(h1 + b1_ref[...], 0.0)                  # (TB, H1) f32

    # Layer 2: MXU matmul, f32 accumulation / bias / relu.
    h2 = jnp.dot(h1.astype(w2_ref.dtype), w2_ref[...],
                 preferred_element_type=jnp.float32, precision=prec)
    h2 = jnp.maximum(h2 + b2_ref[...], 0.0)                  # (TB, H2) f32

    # Layer 3 (N=1): VPU multiply + lane reduction against a lane-dense
    # (1, H2) w3 row, then one XLU relayout to a lane-dense (1, TB) row.
    q = jnp.sum(h2 * w3_ref[...], axis=-1, keepdims=True)    # (TB, 1)
    return q.reshape(1, -1) + b3_ref[...]                    # (1, TB) f32


def _critic_kernel(x_ref, w1_ref, b1_ref, w2_ref, b2_ref, w3_ref, b3_ref,
                   o_ref):
    o_ref[...] = _critic_block(
        x_ref[...], w1_ref, b1_ref, w2_ref, b2_ref, w3_ref, b3_ref
    ).astype(o_ref.dtype)


def _twin_critic_kernel(x_ref,
                        w1a, b1a, w2a, b2a, w3a, b3a,
                        w1b, b1b, w2b, b2b, w3b, b3b,
                        o1_ref, o2_ref):
    x = x_ref[...]
    o1_ref[...] = _critic_block(x, w1a, b1a, w2a, b2a, w3a, b3a).astype(
        o1_ref.dtype)
    o2_ref[...] = _critic_block(x, w1b, b1b, w2b, b2b, w3b, b3b).astype(
        o2_ref.dtype)


def _prep_params(params, compute_dtype):
    """Weights in the MXU compute dtype; biases + w3 row kept f32."""
    w1, b1, w2, b2, w3, b3 = params
    return (w1.astype(compute_dtype),                        # (IN, H1)
            b1.reshape(1, HIDDEN1).astype(jnp.float32),
            w2.astype(compute_dtype),                        # (H1, H2)
            b2.reshape(1, HIDDEN2).astype(jnp.float32),
            w3.reshape(1, HIDDEN2).astype(jnp.float32),      # lane-dense row
            b3.reshape(1, 1).astype(jnp.float32))


def _resident(arr):
    # Weights/biases: same block every grid step -> fetched once, stay in VMEM.
    return pl.BlockSpec(arr.shape, lambda i: (0, 0))


def _prep_inputs(state, action, compute_dtype):
    batch = state.shape[0]
    x = jnp.concatenate([state, action], axis=1).astype(compute_dtype)
    tb, b_pad = _batch_tiling(batch)
    if b_pad != batch:
        x = jnp.pad(x, ((0, b_pad - batch), (0, 0)))
    return x, tb, b_pad


def critic_forward(state, action, params, *, compute_dtype=jnp.bfloat16):
    """state: (B, 33), action: (B, 4) -> (B, 1) f32."""
    batch = state.shape[0]
    x, tb, b_pad = _prep_inputs(state, action, compute_dtype)
    p = _prep_params(params, compute_dtype)

    itemsize = jnp.dtype(compute_dtype).itemsize
    flops = 2 * b_pad * (IN_SIZE * HIDDEN1 + HIDDEN1 * HIDDEN2 + HIDDEN2)
    bytes_accessed = (b_pad * IN_SIZE * itemsize
                      + (IN_SIZE * HIDDEN1 + HIDDEN1 * HIDDEN2) * itemsize
                      + (HIDDEN1 + HIDDEN2 + HIDDEN2 + 1) * 4
                      + b_pad * 4)

    q_row = pl.pallas_call(
        _critic_kernel,
        out_shape=jax.ShapeDtypeStruct((1, b_pad), jnp.float32),
        grid=(b_pad // tb,),
        in_specs=[pl.BlockSpec((tb, IN_SIZE), lambda i: (i, 0))]
                 + [_resident(a) for a in p],
        out_specs=pl.BlockSpec((1, tb), lambda i: (0, i)),   # lane-dense
        compiler_params=pltpu.CompilerParams(
            dimension_semantics=("parallel",),               # v7x dual-TC
            vmem_limit_bytes=32 * 1024 * 1024),
        cost_estimate=pl.CostEstimate(
            flops=flops, transcendentals=0, bytes_accessed=bytes_accessed),
    )(x, *p)

    return q_row.reshape(b_pad, 1)[:batch]


def twin_critic_forward(state, action, params1, params2, *,
                        compute_dtype=jnp.bfloat16):
    """TD3 twin critics fused into one pallas_call sharing the (state,action)
    tile; both weight sets co-reside in VMEM. Returns (q1, q2), each (B, 1)."""
    batch = state.shape[0]
    x, tb, b_pad = _prep_inputs(state, action, compute_dtype)
    p1 = _prep_params(params1, compute_dtype)
    p2 = _prep_params(params2, compute_dtype)

    itemsize = jnp.dtype(compute_dtype).itemsize
    flops = 4 * b_pad * (IN_SIZE * HIDDEN1 + HIDDEN1 * HIDDEN2 + HIDDEN2)
    bytes_accessed = (b_pad * IN_SIZE * itemsize
                      + 2 * (IN_SIZE * HIDDEN1 + HIDDEN1 * HIDDEN2) * itemsize
                      + 2 * (HIDDEN1 + HIDDEN2 + HIDDEN2 + 1) * 4
                      + 2 * b_pad * 4)

    out_spec = pl.BlockSpec((1, tb), lambda i: (0, i))
    q1_row, q2_row = pl.pallas_call(
        _twin_critic_kernel,
        out_shape=(jax.ShapeDtypeStruct((1, b_pad), jnp.float32),
                   jax.ShapeDtypeStruct((1, b_pad), jnp.float32)),
        grid=(b_pad // tb,),
        in_specs=[pl.BlockSpec((tb, IN_SIZE), lambda i: (i, 0))]
                 + [_resident(a) for a in p1]
                 + [_resident(a) for a in p2],
        out_specs=(out_spec, out_spec),
        compiler_params=pltpu.CompilerParams(
            dimension_semantics=("parallel",),
            vmem_limit_bytes=32 * 1024 * 1024),
        cost_estimate=pl.CostEstimate(
            flops=flops, transcendentals=0, bytes_accessed=bytes_accessed),
    )(x, *p1, *p2)

    return q1_row.reshape(b_pad, 1)[:batch], q2_row.reshape(b_pad, 1)[:batch]


def init_critic_params(key):
    """Orthogonal weights (gain 1.0), bias = 0.1, mirroring the PyTorch module.
    Weights stored as (in_features, out_features) so the kernel does x @ W."""
    k1, k2, k3 = jax.random.split(key, 3)
    ortho = jax.nn.initializers.orthogonal(scale=1.0)
    w1 = ortho(k1, (IN_SIZE, HIDDEN1), jnp.float32)
    b1 = jnp.full((1, HIDDEN1), 0.1, jnp.float32)
    w2 = ortho(k2, (HIDDEN1, HIDDEN2), jnp.float32)
    b2 = jnp.full((1, HIDDEN2), 0.1, jnp.float32)
    w3 = ortho(k3, (HIDDEN2, 1), jnp.float32)
    b3 = jnp.full((1, 1), 0.1, jnp.float32)
    return (w1, b1, w2, b2, w3, b3)


def critic_reference(state, action, params):
    """Pure-JAX reference for correctness checking."""
    w1, b1, w2, b2, w3, b3 = params
    x = jnp.concatenate([state, action], axis=1)
    h1 = jnp.maximum(x @ w1 + b1, 0.0)
    h2 = jnp.maximum(h1 @ w2 + b2, 0.0)
    return h2 @ w3 + b3


if __name__ == "__main__":
    key = jax.random.PRNGKey(0)
    kp1, kp2, ks, ka = jax.random.split(key, 4)

    batch = 8
    params1 = init_critic_params(kp1)
    params2 = init_critic_params(kp2)
    state = jax.random.normal(ks, (batch, STATE_SIZE), jnp.float32)
    action = jax.random.normal(ka, (batch, ACTION_SIZE), jnp.float32)

    q_ref1 = critic_reference(state, action, params1)
    q_ref2 = critic_reference(state, action, params2)

    # Default bf16 MXU-input path (f32 accumulation / bias / relu).
    q = jax.block_until_ready(critic_forward(state, action, params1))
    assert q.shape == (batch, 1)
    assert jnp.allclose(q, q_ref1, atol=1e-1, rtol=1e-1)

    # Exact-f32 path (precision=HIGHEST inside the kernel).
    q_f32 = jax.block_until_ready(
        critic_forward(state, action, params1, compute_dtype=jnp.float32))
    assert q_f32.shape == (batch, 1)
    assert jnp.allclose(q_f32, q_ref1, atol=1e-3, rtol=1e-3)

    # Non-multiple-of-8 batch exercises the padding path.
    q5 = jax.block_until_ready(critic_forward(state[:5], action[:5], params1))
    assert q5.shape == (5, 1)
    assert jnp.allclose(q5, q_ref1[:5], atol=1e-1, rtol=1e-1)

    # Fused twin critics: one pallas_call, shared state/action tile.
    q1, q2 = jax.block_until_ready(
        twin_critic_forward(state, action, params1, params2))
    assert q1.shape == (batch, 1) and q2.shape == (batch, 1)
    assert jnp.allclose(q1, q_ref1, atol=1e-1, rtol=1e-1)
    assert jnp.allclose(q2, q_ref2, atol=1e-1, rtol=1e-1)

    print("KERNEL_OK")
</pallas_src>

<mosaic_0001>
module attributes {stable_mosaic.version = 11 : i64} {
  func.func @_critic_kernel(%arg0: i32, %arg1: memref<8x37xbf16, #tpu.memory_space<vmem>>, %arg2: memref<37x256xbf16, #tpu.memory_space<vmem>>, %arg3: memref<1x256xf32, #tpu.memory_space<vmem>>, %arg4: memref<256x256xbf16, #tpu.memory_space<vmem>>, %arg5: memref<1x256xf32, #tpu.memory_space<vmem>>, %arg6: memref<1x256xf32, #tpu.memory_space<vmem>>, %arg7: memref<1x1xf32, #tpu.memory_space<vmem>>, %arg8: memref<1x8xf32, #tpu.memory_space<vmem>>) attributes {dimension_semantics = [#tpu.dimension_semantics<parallel>], iteration_bounds = array<i64: 1>, scalar_prefetch = 0 : i64, scratch_operands = 0 : i64, tpu.core_type = #tpu.core_type<tc>, window_params = [{transform_indices = @transform_0, window_bounds = array<i64: 8, 37>}, {pipeline_mode = #tpu.pipeline_mode<synchronous>, transform_indices = @transform_1, window_bounds = array<i64: 37, 256>}, {pipeline_mode = #tpu.pipeline_mode<synchronous>, transform_indices = @transform_2, window_bounds = array<i64: 1, 256>}, {pipeline_mode = #tpu.pipeline_mode<synchronous>, transform_indices = @transform_3, window_bounds = array<i64: 256, 256>}, {pipeline_mode = #tpu.pipeline_mode<synchronous>, transform_indices = @transform_4, window_bounds = array<i64: 1, 256>}, {pipeline_mode = #tpu.pipeline_mode<synchronous>, transform_indices = @transform_5, window_bounds = array<i64: 1, 256>}, {pipeline_mode = #tpu.pipeline_mode<synchronous>, transform_indices = @transform_6, window_bounds = array<i64: 1, 1>}, {transform_indices = @transform_7, window_bounds = array<i64: 1, 8>}]} {
    %c0 = arith.constant 0 : index
    %c0_0 = arith.constant 0 : index
    %0 = vector.load %arg1[%c0, %c0_0] : memref<8x37xbf16, #tpu.memory_space<vmem>>, vector<8x37xbf16>
    %c0_1 = arith.constant 0 : index
    %c0_2 = arith.constant 0 : index
    %1 = vector.load %arg2[%c0_1, %c0_2] : memref<37x256xbf16, #tpu.memory_space<vmem>>, vector<37x256xbf16>
    %cst = arith.constant dense<0.000000e+00> : vector<8x256xf32>
    %2 = tpu.matmul %0, %1, %cst {dimension_numbers = #tpu.dot_dimension_numbers<[1], [0], [0], [1], [0, 0, 1, 1], [], []>} : vector<8x37xbf16>, vector<37x256xbf16>, vector<8x256xf32> -> vector<8x256xf32>
    %c0_3 = arith.constant 0 : index
    %c0_4 = arith.constant 0 : index
    %3 = vector.load %arg3[%c0_3, %c0_4] : memref<1x256xf32, #tpu.memory_space<vmem>>, vector<1x256xf32>
    %4 = vector.broadcast %3 : vector<1x256xf32> to vector<8x256xf32>
    %5 = arith.addf %2, %4 : vector<8x256xf32>
    %cst_5 = arith.constant 0.000000e+00 : f32
    %6 = vector.broadcast %cst_5 : f32 to vector<8x256xf32>
    %7 = arith.maximumf %5, %6 : vector<8x256xf32>
    %8 = arith.truncf %7 : vector<8x256xf32> to vector<8x256xbf16>
    %c0_6 = arith.constant 0 : index
    %c0_7 = arith.constant 0 : index
    %9 = vector.load %arg4[%c0_6, %c0_7] : memref<256x256xbf16, #tpu.memory_space<vmem>>, vector<256x256xbf16>
    %cst_8 = arith.constant dense<0.000000e+00> : vector<8x256xf32>
    %10 = tpu.matmul %8, %9, %cst_8 {dimension_numbers = #tpu.dot_dimension_numbers<[1], [0], [0], [1], [0, 0, 1, 1], [], []>} : vector<8x256xbf16>, vector<256x256xbf16>, vector<8x256xf32> -> vector<8x256xf32>
    %c0_9 = arith.constant 0 : index
    %c0_10 = arith.constant 0 : index
    %11 = vector.load %arg5[%c0_9, %c0_10] : memref<1x256xf32, #tpu.memory_space<vmem>>, vector<1x256xf32>
    %12 = vector.broadcast %11 : vector<1x256xf32> to vector<8x256xf32>
    %13 = arith.addf %10, %12 : vector<8x256xf32>
    %cst_11 = arith.constant 0.000000e+00 : f32
    %14 = vector.broadcast %cst_11 : f32 to vector<8x256xf32>
    %15 = arith.maximumf %13, %14 : vector<8x256xf32>
    %c0_12 = arith.constant 0 : index
    %c0_13 = arith.constant 0 : index
    %16 = vector.load %arg6[%c0_12, %c0_13] : memref<1x256xf32, #tpu.memory_space<vmem>>, vector<1x256xf32>
    %17 = vector.broadcast %16 : vector<1x256xf32> to vector<8x256xf32>
    %18 = arith.mulf %15, %17 : vector<8x256xf32>
    %cst_14 = arith.constant dense<0.000000e+00> : vector<8xf32>
    %19 = vector.multi_reduction <add>, %18, %cst_14 [1] : vector<8x256xf32> to vector<8xf32>
    %20 = vector.shape_cast %19 : vector<8xf32> to vector<8x1xf32>
    %21 = vector.shape_cast %20 : vector<8x1xf32> to vector<1x8xf32>
    %c0_15 = arith.constant 0 : index
    %c0_16 = arith.constant 0 : index
    %22 = vector.load %arg7[%c0_15, %c0_16] : memref<1x1xf32, #tpu.memory_space<vmem>>, vector<1x1xf32>
    %23 = vector.broadcast %22 : vector<1x1xf32> to vector<1x8xf32>
    %24 = arith.addf %21, %23 : vector<1x8xf32>
    %c0_17 = arith.constant 0 : index
    %c0_18 = arith.constant 0 : index
    %25 = vector.load %arg8[%c0_17, %c0_18] : memref<1x8xf32, #tpu.memory_space<vmem>>, vector<1x8xf32>
    tpu.vector_store %arg8[%c0_17, %c0_18], %24 {strides = array<i32>} : memref<1x8xf32, #tpu.memory_space<vmem>>, vector<1x8xf32>,
    return
  }
  func.func @transform_0(%arg0: i32) -> (i32, i32) {
    %c0_i32 = arith.constant 0 : i32
    %c0_i32_0 = arith.constant 0 : i32
    return %arg0, %c0_i32 : i32, i32
  }
  func.func @transform_1(%arg0: i32) -> (i32, i32) {
    %c0_i32 = arith.constant 0 : i32
    %c0_i32_0 = arith.constant 0 : i32
    %c0_i32_1 = arith.constant 0 : i32
    return %c0_i32, %c0_i32_0 : i32, i32
  }
  func.func @transform_2(%arg0: i32) -> (i32, i32) {
    %c0_i32 = arith.constant 0 : i32
    %c0_i32_0 = arith.constant 0 : i32
    %c0_i32_1 = arith.constant 0 : i32
    return %c0_i32, %c0_i32_0 : i32, i32
  }
  func.func @transform_3(%arg0: i32) -> (i32, i32) {
    %c0_i32 = arith.constant 0 : i32
    %c0_i32_0 = arith.constant 0 : i32
    %c0_i32_1 = arith.constant 0 : i32
    return %c0_i32, %c0_i32_0 : i32, i32
  }
  func.func @transform_4(%arg0: i32) -> (i32, i32) {
    %c0_i32 = arith.constant 0 : i32
    %c0_i32_0 = arith.constant 0 : i32
    %c0_i32_1 = arith.constant 0 : i32
    return %c0_i32, %c0_i32_0 : i32, i32
  }
  func.func @transform_5(%arg0: i32) -> (i32, i32) {
    %c0_i32 = arith.constant 0 : i32
    %c0_i32_0 = arith.constant 0 : i32
    %c0_i32_1 = arith.constant 0 : i32
    return %c0_i32, %c0_i32_0 : i32, i32
  }
  func.func @transform_6(%arg0: i32) -> (i32, i32) {
    %c0_i32 = arith.constant 0 : i32
    %c0_i32_0 = arith.constant 0 : i32
    %c0_i32_1 = arith.constant 0 : i32
    return %c0_i32, %c0_i32_0 : i32, i32
  }
  func.func @transform_7(%arg0: i32) -> (i32, i32) {
    %c0_i32 = arith.constant 0 : i32
    %c0_i32_0 = arith.constant 0 : i32
    return %c0_i32, %arg0 : i32, i32
  }
}

</mosaic_0001>

<llo_original>
// kernel: tpu_custom_call.1
$region0: #{tpu_custom_call.1}
  #allocation0 [shape = 'u32[]', space=smem, size = 0x4, offset = 0x4, fixed_abs, tag = 'smem constant byte address 0x4 - core index']
  #allocation1 [shape = 'u32[144,128]{1,0:T(1,128)}', space=vmem, size = 0x12000, scoped, tag = 'internal scratch']
  #allocation2 [shape = 'f32[1,1]{1,0:T(1,128)S(1)}', space=vmem, size = 0x200, scoped, tag = 'scoped memory for tpu_custom_call.1']
  %s0 = inlined_call_operand.hbm [shape: bf16[8,37], index: 0, kind: input, shape index: {}]
  %s1 = inlined_call_operand.hbm [shape: bf16[37,256], index: 1, kind: input, shape index: {}]
  %s2 = inlined_call_operand.vmem [shape: f32[1,256], index: 2, kind: input, shape index: {}]
  %s3 = inlined_call_operand.hbm [shape: bf16[256,256], index: 3, kind: input, shape index: {}]
  %s4 = inlined_call_operand.vmem [shape: f32[1,256], index: 4, kind: input, shape index: {}]
  %s5 = inlined_call_operand.vmem [shape: f32[1,256], index: 5, kind: input, shape index: {}]
  %s6 = inlined_call_operand.<no memory space> [shape: f32[1,1], index: 6, kind: input, shape index: {}]
  %s7 = inlined_call_operand.hbm [shape: f32[1,8], index: 7, kind: output, shape index: {}]
  %s8 = sld [smem:[#allocation0]]
  $region50: #{tpu_custom_call.1} parent=0
    _
  %s10 = ssub.s32 1, %s8
  %s11 = scalar_select 0, %s10, %s8
  %v12 = vstv %s6
  %13 = vst [vmem:[#allocation2] sm:$0x1] %v12
  $region1: #{tpu_custom_call.1} parent=0
    #allocation3 [shape = 'u8[2048]{0}', space=vmem, size = 0x800, scoped, tag = 'input window, operand 0, single buffered']
    #allocation4 [shape = 's32[1]{0}', space=sflag, size = 0x4, scoped, tag = 'scoped memory for tpu_custom_call.1']
    #allocation5 [shape = 's32[1]{0}', space=sflag, size = 0x4, scoped, tag = 'scoped memory for tpu_custom_call.1']
    #allocation6 [shape = 'u8[20480]{0}', space=vmem, size = 0x5000, scoped, tag = 'input window, operand 1, single buffered']
    #allocation7 [shape = 's32[1]{0}', space=sflag, size = 0x4, scoped, tag = 'scoped memory for tpu_custom_call.1']
    #allocation8 [shape = 'u8[131072]{0}', space=vmem, size = 0x20000, scoped, tag = 'input window, operand 3, single buffered']
    #allocation9 [shape = 'u8[512]{0}', space=vmem, size = 0x400, scoped, tag = 'output window, operand 0, single buffered']
    %14 = vsyncpa [#allocation4], 0
    %15 = vsyncpa [#allocation7], 0
    %16 = vsyncpa [#allocation5], 0
    // Predicated region
    $region2: #{tpu_custom_call.1} parent=1 // pred_check
      _
    $region3: #{tpu_custom_call.1} parent=1 // pred_check_branch
      %18 = sbr.rel (0) target = $region5
    $region4: #{tpu_custom_call.1} parent=1 // pred_region
      %s20 = ssub.s32 64, 64
      %21 = vsyncadd [#allocation4], %s20
      %s23 = sshll.u32 [#allocation3], 4
      %s24 = int_to_ptr.vmem [resolvable:$true] %s23
      %26 = dma.hbm_to_vmem [thread:$0]  %s0, 64, %s24, [#allocation4]
    $region5: #{tpu_custom_call.1} parent=1 // pred_fallthru
      _
    // Predicated region
    $region6: #{tpu_custom_call.1} parent=1 // pred_check
      _
    $region7: #{tpu_custom_call.1} parent=1 // pred_check_branch
      %28 = sbr.rel (0) target = $region9
    $region8: #{tpu_custom_call.1} parent=1 // pred_region
      %s30 = ssub.s32 640, 640
      %31 = vsyncadd [#allocation7], %s30
      %s32 = sshll.u32 [#allocation6], 4
      %s33 = int_to_ptr.vmem [resolvable:$true] %s32
      %38 = dma.hbm_to_vmem [thread:$0]  %s1, 640, %s33, [#allocation7], 128, 128, 8
    $region9: #{tpu_custom_call.1} parent=1 // pred_fallthru
      _
    // Predicated region
    $region10: #{tpu_custom_call.1} parent=1 // pred_check
      _
    $region11: #{tpu_custom_call.1} parent=1 // pred_check_branch
      %40 = sbr.rel (0) target = $region13
    $region12: #{tpu_custom_call.1} parent=1 // pred_region
      _
    $region13: #{tpu_custom_call.1} parent=1 // pred_fallthru
      _
    // Predicated region
    $region14: #{tpu_custom_call.1} parent=1 // pred_check
      _
    $region15: #{tpu_custom_call.1} parent=1 // pred_check_branch
      %42 = sbr.rel (0) target = $region17
    $region16: #{tpu_custom_call.1} parent=1 // pred_region
      %s44 = ssub.s32 4096, 4096
      %45 = vsyncadd [#allocation7], %s44
      %s46 = sshll.u32 [#allocation8], 4
      %s47 = int_to_ptr.vmem [resolvable:$true] %s46
      %52 = dma.hbm_to_vmem [thread:$0]  %s3, 4096, %s47, [#allocation7], 128, 128, 8
    $region17: #{tpu_custom_call.1} parent=1 // pred_fallthru
      _
    // Predicated region
    $region18: #{tpu_custom_call.1} parent=1 // pred_check
      _
    $region19: #{tpu_custom_call.1} parent=1 // pred_check_branch
      %54 = sbr.rel (0) target = $region21
    $region20: #{tpu_custom_call.1} parent=1 // pred_region
      _
    $region21: #{tpu_custom_call.1} parent=1 // pred_fallthru
      _
    // Predicated region
    $region22: #{tpu_custom_call.1} parent=1 // pred_check
      _
    $region23: #{tpu_custom_call.1} parent=1 // pred_check_branch
      %56 = sbr.rel (0) target = $region25
    $region24: #{tpu_custom_call.1} parent=1 // pred_region
      _
    $region25: #{tpu_custom_call.1} parent=1 // pred_fallthru
      _
    // Predicated region
    $region26: #{tpu_custom_call.1} parent=1 // pred_check
      _
    $region27: #{tpu_custom_call.1} parent=1 // pred_check_branch
      %58 = sbr.rel (0) target = $region29
    $region28: #{tpu_custom_call.1} parent=1 // pred_region
      _
    $region29: #{tpu_custom_call.1} parent=1 // pred_fallthru
      _
    // Predicated region
    $region30: #{tpu_custom_call.1} parent=1 // pred_check
      _
    $region31: #{tpu_custom_call.1} parent=1 // pred_check_branch
      %60 = sbr.rel (0) target = $region33
    $region32: #{tpu_custom_call.1} parent=1 // pred_region
      %61 = dma.done [#allocation4], 64
    $region33: #{tpu_custom_call.1} parent=1 // pred_fallthru
      _
    // Predicated region
    $region34: #{tpu_custom_call.1} parent=1 // pred_check
      _
    $region35: #{tpu_custom_call.1} parent=1 // pred_check_branch
      %63 = sbr.rel (0) target = $region37
    $region36: #{tpu_custom_call.1} parent=1 // pred_region
      %64 = dma.done [#allocation7], 640
    $region37: #{tpu_custom_call.1} parent=1 // pred_fallthru
      _
    // Predicated region
    $region38: #{tpu_custom_call.1} parent=1 // pred_check
      _
    $region39: #{tpu_custom_call.1} parent=1 // pred_check_branch
      %66 = sbr.rel (0) target = $region41
    $region40: #{tpu_custom_call.1} parent=1 // pred_region
      %67 = dma.done [#allocation7], 4096
    $region41: #{tpu_custom_call.1} parent=1 // pred_fallthru
      _
    %v69 = vld [vmem:[#allocation3] sm:$0xf]
    %v70 = vld [vmem:[#allocation6] sm:$0xff]
    %v71 = vld [vmem:[#allocation6 + $0x8] sm:$0xff]
    %v72 = vld [vmem:[#allocation6 + $0x10] sm:$0xff]
    %v73 = vld [vmem:[#allocation6 + $0x18] sm:$0xff]
    %v74 = vld [vmem:[#allocation6 + $0x20] sm:$0x77]
    %v75 = vld [vmem:[%s2] sm:$0x3]
    %v77 = vlaneseq
    %v78 = vshrl.u32 %v77, 7
    %v79 = vsub.s32 0, %v78
    %v80 = vrot.slane %v75, %v79
    %v81 = vlaneseq
    %v82 = vshrl.u32 %v81, 7
    %v83 = vsub.s32 1, %v82
    %v84 = vrot.slane %v75, %v83
    %v92 = vunpack.c.l.b16 %v70
    %v93 = vunpack.c.h.b16 %v70
    %v94 = vunpack.c.l.b16 %v71
    %v95 = vunpack.c.h.b16 %v71
    %v96 = vunpack.c.l.b16 %v72
    %v97 = vunpack.c.h.b16 %v72
    %v98 = vunpack.c.l.b16 %v73
    %v99 = vunpack.c.h.b16 %v73
    %v100 = vunpack.c.l.b16 %v74
    %v101 = vunpack.c.h.b16 %v74
    %v102 = vpack.c.b16 %v94, %v92
    %v103 = vpack.c.b16 %v95, %v93
    %v104 = vpack.c.b16 %v98, %v96
    %v105 = vpack.c.b16 %v99, %v97
    %v106 = vpack.c.b16 %v100, %v100
    %v107 = vpack.c.b16 %v101, %v101
    %vm112 = vcmask 302080
    %v114 = vsel %vm112, %v69, 0
    %vm116 = vcmask 1041408
    %vm117 = vcmask 1042432
    %v118 = vsel %vm116, 4294967295, 65535
    %v119 = vsel %vm117, %v118, 0
    %v121 = vand.u32 %v106, %v119
    %v124 = vand.u32 %v107, %v119
    %126 = vmatprep.subr.bf16.mxu0 0
    %127 = vmatpush1.bf16.msra.mxu0 0
    %128 = vmatprep.subr.bf16.mxu0 0
    %129 = vmatpush1.bf16.msra.mxu0 0
    %130 = vmatprep.subr.bf16.mxu0 0
    %131 = vmatpush1.bf16.msra.mxu0 0
    %132 = vmatprep.subr.bf16.mxu0 0
    %133 = vmatpush1.bf16.msra.mxu0 0
    %134 = vmatprep.subr.bf16.mxu0 0
    %135 = vmatpush1.bf16.msra.mxu0 0
    %136 = vmatprep.subr.bf16.mxu0 %v124
    %137 = vmatpush1.bf16.msra.mxu0 %v121
    %138 = vmatprep.subr.bf16.mxu0 %v105
    %139 = vmatpush1.bf16.msra.mxu0 %v104
    %140 = vmatprep.subr.bf16.mxu0 %v103
    %141 = vmatpush1.bf16.msra.mxu0 %v102
    %142 = vmatprep.subr.bf16.mxu0 0
    %143 = vmatpush2.bf16.msra.mxu0 0
    %144 = vmatprep.subr.bf16.mxu0 0
    %145 = vmatpush2.bf16.msra.mxu0 0
    %146 = vmatprep.subr.bf16.mxu0 0
    %147 = vmatpush2.bf16.msra.mxu0 0
    %148 = vmatprep.subr.bf16.mxu0 0
    %149 = vmatpush2.bf16.msra.mxu0 0
    %150 = vmatprep.subr.bf16.mxu0 0
    %151 = vmatpush2.bf16.msra.mxu0 0
    %152 = vmatprep.subr.bf16.mxu0 0
    %153 = vmatpush2.bf16.msra.mxu0 0
    %154 = vmatprep.subr.bf16.mxu0 0
    %155 = vmatpush2.bf16.msra.mxu0 0
    %156 = vmatprep.subr.bf16.mxu0 0
    %157 = vmatpush2.bf16.msra.mxu0 0
    %158 = vmatprep.mubr.bf16.mxu0 0
    %159 = vmatmul.mubr.bf16.gmra.mxu0 %v114
    %v160 = vpop.f32.mrf.mxu0
    %v161 = vadd.f32 %v80, %v160
    %v162 = vpop.f32.mrf.mxu0
    %v163 = vadd.f32 %v84, %v162
    %v164 = vpop.f32.mrf.mxu0
    %v165 = vpop.f32.mrf.mxu0
    %166 = vdwg.mxu0
    %v167 = vmax.f32 %v161, 0.0
    %v168 = vmax.f32 %v163, 0.0
    %v169 = vpack.c.bf16 %v167, %v167
    %v170 = vpack.c.bf16 %v168, %v168
    %v171 = vld [vmem:[#allocation8] sm:$0xff]
    %v172 = vld [vmem:[#allocation8 + $0x8] sm:$0xff]
    %v173 = vld [vmem:[#allocation8 + $0x10] sm:$0xff]
    %v174 = vld [vmem:[#allocation8 + $0x18] sm:$0xff]
    %v175 = vld [vmem:[#allocation8 + $0x20] sm:$0xff]
    %v176 = vld [vmem:[#allocation8 + $0x28] sm:$0xff]
    %v177 = vld [vmem:[#allocation8 + $0x30] sm:$0xff]
    %v178 = vld [vmem:[#allocation8 + $0x38] sm:$0xff]
    %v179 = vld [vmem:[#allocation8 + $0x40] sm:$0xff]
    %v180 = vld [vmem:[#allocation8 + $0x48] sm:$0xff]
    %v181 = vld [vmem:[#allocation8 + $0x50] sm:$0xff]
    %v182 = vld [vmem:[#allocation8 + $0x58] sm:$0xff]
    %v183 = vld [vmem:[#allocation8 + $0x60] sm:$0xff]
    %v184 = vld [vmem:[#allocation8 + $0x68] sm:$0xff]
    %v185 = vld [vmem:[#allocation8 + $0x70] sm:$0xff]
    %v186 = vld [vmem:[#allocation8 + $0x78] sm:$0xff]
    %v187 = vld [vmem:[#allocation8 + $0x80] sm:$0xff]
    %v188 = vld [vmem:[#allocation8 + $0x88] sm:$0xff]
    %v189 = vld [vmem:[#allocation8 + $0x90] sm:$0xff]
    %v190 = vld [vmem:[#allocation8 + $0x98] sm:$0xff]
    %v191 = vld [vmem:[#allocation8 + $0xa0] sm:$0xff]
    %v192 = vld [vmem:[#allocation8 + $0xa8] sm:$0xff]
    %v193 = vld [vmem:[#allocation8 + $0xb0] sm:$0xff]
    %v194 = vld [vmem:[#allocation8 + $0xb8] sm:$0xff]
    %v195 = vld [vmem:[#allocation8 + $0xc0] sm:$0xff]
    %v196 = vld [vmem:[#allocation8 + $0xc8] sm:$0xff]
    %v197 = vld [vmem:[#allocation8 + $0xd0] sm:$0xff]
    %v198 = vld [vmem:[#allocation8 + $0xd8] sm:$0xff]
    %v199 = vld [vmem:[#allocation8 + $0xe0] sm:$0xff]
    %v200 = vld [vmem:[#allocation8 + $0xe8] sm:$0xff]
    %v201 = vld [vmem:[#allocation8 + $0xf0] sm:$0xff]
    %v202 = vld [vmem:[#allocation8 + $0xf8] sm:$0xff]
    %v203 = vld [vmem:[%s4] sm:$0x3]
    %v205 = vlaneseq
    %v206 = vshrl.u32 %v205, 7
    %v207 = vsub.s32 0, %v206
    %v208 = vrot.slane %v203, %v207
    %v209 = vlaneseq
    %v210 = vshrl.u32 %v209, 7
    %v211 = vsub.s32 1, %v210
    %v212 = vrot.slane %v203, %v211
    %v247 = vunpack.c.l.b16 %v171
    %v248 = vunpack.c.h.b16 %v171
    %v249 = vunpack.c.l.b16 %v172
    %v250 = vunpack.c.h.b16 %v172
    %v251 = vunpack.c.l.b16 %v173
    %v252 = vunpack.c.h.b16 %v173
    %v253 = vunpack.c.l.b16 %v174
    %v254 = vunpack.c.h.b16 %v174
    %v255 = vunpack.c.l.b16 %v175
    %v256 = vunpack.c.h.b16 %v175
    %v257 = vunpack.c.l.b16 %v176
    %v258 = vunpack.c.h.b16 %v176
    %v259 = vunpack.c.l.b16 %v177
    %v260 = vunpack.c.h.b16 %v177
    %v261 = vunpack.c.l.b16 %v178
    %v262 = vunpack.c.h.b16 %v178
    %v263 = vunpack.c.l.b16 %v179
    %v264 = vunpack.c.h.b16 %v179
    %v265 = vunpack.c.l.b16 %v180
    %v266 = vunpack.c.h.b16 %v180
    %v267 = vunpack.c.l.b16 %v181
    %v268 = vunpack.c.h.b16 %v181
    %v269 = vunpack.c.l.b16 %v182
    %v270 = vunpack.c.h.b16 %v182
    %v271 = vunpack.c.l.b16 %v183
    %v272 = vunpack.c.h.b16 %v183
    %v273 = vunpack.c.l.b16 %v184
    %v274 = vunpack.c.h.b16 %v184
    %v275 = vunpack.c.l.b16 %v185
    %v276 = vunpack.c.h.b16 %v185
    %v277 = vunpack.c.l.b16 %v186
    %v278 = vunpack.c.h.b16 %v186
    %v279 = vunpack.c.l.b16 %v187
    %v280 = vunpack.c.h.b16 %v187
    %v281 = vunpack.c.l.b16 %v188
    %v282 = vunpack.c.h.b16 %v188
    %v283 = vunpack.c.l.b16 %v189
    %v284 = vunpack.c.h.b16 %v189
    %v285 = vunpack.c.l.b16 %v190
    %v286 = vunpack.c.h.b16 %v190
    %v287 = vunpack.c.l.b16 %v191
    %v288 = vunpack.c.h.b16 %v191
    %v289 = vunpack.c.l.b16 %v192
    %v290 = vunpack.c.h.b16 %v192
    %v291 = vunpack.c.l.b16 %v193
    %v292 = vunpack.c.h.b16 %v193
    %v293 = vunpack.c.l.b16 %v194
    %v294 = vunpack.c.h.b16 %v194
    %v295 = vunpack.c.l.b16 %v195
    %v296 = vunpack.c.h.b16 %v195
    %v297 = vunpack.c.l.b16 %v196
    %v298 = vunpack.c.h.b16 %v196
    %v299 = vunpack.c.l.b16 %v197
    %v300 = vunpack.c.h.b16 %v197
    %v301 = vunpack.c.l.b16 %v198
    %v302 = vunpack.c.h.b16 %v198
    %v303 = vunpack.c.l.b16 %v199
    %v304 = vunpack.c.h.b16 %v199
    %v305 = vunpack.c.l.b16 %v200
    %v306 = vunpack.c.h.b16 %v200
    %v307 = vunpack.c.l.b16 %v201
    %v308 = vunpack.c.h.b16 %v201
    %v309 = vunpack.c.l.b16 %v202
    %v310 = vunpack.c.h.b16 %v202
    %v311 = vpack.c.b16 %v249, %v247
    %v312 = vpack.c.b16 %v250, %v248
    %v313 = vpack.c.b16 %v253, %v251
    %v314 = vpack.c.b16 %v254, %v252
    %v315 = vpack.c.b16 %v257, %v255
    %v316 = vpack.c.b16 %v258, %v256
    %v317 = vpack.c.b16 %v261, %v259
    %v318 = vpack.c.b16 %v262, %v260
    %v319 = vpack.c.b16 %v265, %v263
    %v320 = vpack.c.b16 %v266, %v264
    %v321 = vpack.c.b16 %v269, %v267
    %v322 = vpack.c.b16 %v270, %v268
    %v323 = vpack.c.b16 %v273, %v271
    %v324 = vpack.c.b16 %v274, %v272
    %v325 = vpack.c.b16 %v277, %v275
    %v326 = vpack.c.b16 %v278, %v276
    %v327 = vpack.c.b16 %v281, %v279
    %v328 = vpack.c.b16 %v282, %v280
    %v329 = vpack.c.b16 %v285, %v283
    %v330 = vpack.c.b16 %v286, %v284
    %v331 = vpack.c.b16 %v289, %v287
    %v332 = vpack.c.b16 %v290, %v288
    %v333 = vpack.c.b16 %v293, %v291
    %v334 = vpack.c.b16 %v294, %v292
    %v335 = vpack.c.b16 %v297, %v295
    %v336 = vpack.c.b16 %v298, %v296
    %v337 = vpack.c.b16 %v301, %v299
    %v338 = vpack.c.b16 %v302, %v300
    %v339 = vpack.c.b16 %v305, %v303
    %v340 = vpack.c.b16 %v306, %v304
    %v341 = vpack.c.b16 %v309, %v307
    %v342 = vpack.c.b16 %v310, %v308
    %375 = vmatprep.subr.bf16.mxu0 %v326
    %376 = vmatpush1.bf16.msra.mxu0 %v325
    %377 = vmatprep.subr.bf16.mxu0 %v324
    %378 = vmatpush1.bf16.msra.mxu0 %v323
    %379 = vmatprep.subr.bf16.mxu0 %v322
    %380 = vmatpush1.bf16.msra.mxu0 %v321
    %381 = vmatprep.subr.bf16.mxu0 %v320
    %382 = vmatpush1.bf16.msra.mxu0 %v319
    %383 = vmatprep.subr.bf16.mxu0 %v318
    %384 = vmatpush1.bf16.msra.mxu0 %v317
    %385 = vmatprep.subr.bf16.mxu0 %v316
    %386 = vmatpush1.bf16.msra.mxu0 %v315
    %387 = vmatprep.subr.bf16.mxu0 %v314
    %388 = vmatpush1.bf16.msra.mxu0 %v313
    %389 = vmatprep.subr.bf16.mxu0 %v312
    %390 = vmatpush1.bf16.msra.mxu0 %v311
    %391 = vmatprep.subr.bf16.mxu0 %v342
    %392 = vmatpush2.bf16.msra.mxu0 %v341
    %393 = vmatprep.subr.bf16.mxu0 %v340
    %394 = vmatpush2.bf16.msra.mxu0 %v339
    %395 = vmatprep.subr.bf16.mxu0 %v338
    %396 = vmatpush2.bf16.msra.mxu0 %v337
    %397 = vmatprep.subr.bf16.mxu0 %v336
    %398 = vmatpush2.bf16.msra.mxu0 %v335
    %399 = vmatprep.subr.bf16.mxu0 %v334
    %400 = vmatpush2.bf16.msra.mxu0 %v333
    %401 = vmatprep.subr.bf16.mxu0 %v332
    %402 = vmatpush2.bf16.msra.mxu0 %v331
    %403 = vmatprep.subr.bf16.mxu0 %v330
    %404 = vmatpush2.bf16.msra.mxu0 %v329
    %405 = vmatprep.subr.bf16.mxu0 %v328
    %406 = vmatpush2.bf16.msra.mxu0 %v327
    %407 = vmatprep.mubr.bf16.mxu0 %v170
    %408 = vmatmul.mubr.bf16.gmra.mxu0 %v169
    %v409 = vpop.f32.mrf.mxu0
    %v410 = vadd.f32 %v208, %v409
    %v411 = vpop.f32.mrf.mxu0
    %v412 = vadd.f32 %v212, %v411
    %v413 = vpop.f32.mrf.mxu0
    %v414 = vpop.f32.mrf.mxu0
    %415 = vdwg.mxu0
    %v416 = vmax.f32 %v410, 0.0
    %v417 = vmax.f32 %v412, 0.0
    %v418 = vld [vmem:[%s5] sm:$0x3]
    %v420 = vlaneseq
    %v421 = vshrl.u32 %v420, 7
    %v422 = vsub.s32 0, %v421
    %v423 = vrot.slane %v418, %v422
    %v424 = vlaneseq
    %v425 = vshrl.u32 %v424, 7
    %v426 = vsub.s32 1, %v425
    %v427 = vrot.slane %v418, %v426
    %v430 = vmul.f32 %v416, %v423
    %v431 = vmul.f32 %v417, %v427
    %v432 = vadd.f32 %v430, %v431
    %433 = vadd.xlane.f32.xlu0 %v432
    %v434 = vpop.xlane.xlu0 %433
    %v435 = vld [vmem:[#allocation2] sm:$0x1]
    %437 = vset.pattern.permute.xlu0 0
    %438 = vperm.xlu0 %437, %v435
    %v439 = vpop.permute.xlu0 %438
    %v441 = vlaneseq
    %v442 = vshrl.u32 %v441, 7
    %v443 = vsub.s32 0, %v442
    %v444 = vrot.slane %v439, %v443
    %v445 = vadd.f32 %v434, %v444
    %v447 = vlaneseq
    %v448 = vand.u32 %v447, 127
    %v449 = vlaneseq
    %v450 = vshrl.u32 %v449, 7
    %v451 = vsub.s32 %v448, %v450
    %v452 = vrot.slane %v445, %v451
    %vm454 = vcmask 57344
    %455 = vst.msk [vmem:[#allocation9] sm:$0x1] %vm454, %v452
    // Predicated region
    $region42: #{tpu_custom_call.1} parent=1 // pred_check
      _
    $region43: #{tpu_custom_call.1} parent=1 // pred_check_branch
      %457 = sbr.rel (0) target = $region45
    $region44: #{tpu_custom_call.1} parent=1 // pred_region
      %s459 = ssub.s32 16, 16
      %460 = vsyncadd [#allocation5], %s459
      %s462 = sshll.u32 [#allocation9], 4
      %s463 = int_to_ptr.vmem [resolvable:$true] %s462
      %465 = dma.vmem_to_hbm [thread:$0]  %s463, 16, %s7, [#allocation5]
    $region45: #{tpu_custom_call.1} parent=1 // pred_fallthru
      _
    // Predicated region
    $region46: #{tpu_custom_call.1} parent=1 // pred_check
      _
    $region47: #{tpu_custom_call.1} parent=1 // pred_check_branch
      %467 = sbr.rel (0) target = $region49
    $region48: #{tpu_custom_call.1} parent=1 // pred_region
      %468 = dma.done [#allocation5], 16
    $region49: #{tpu_custom_call.1} parent=1 // pred_fallthru
      _
    %469 = vsyncpa [#allocation4], 1
    %470 = vsyncpa [#allocation7], 1
    %471 = vsyncpa [#allocation5], 1

</llo_original>
